<compile_context>
chip_gen: v7x
topology: tpu7x:2x2x1
jax: 0.10.0
libtpu: 0.0.40
codegen_flags: <defaults>
</compile_context>

<pallas_src>
import functools

import jax
import jax.numpy as jnp
from jax.experimental import pallas as pl
from jax.experimental.pallas import tpu as pltpu

N_LAYERS = 3  # PGCF.forward hard-codes idx = [2, 0, 1], i.e. exactly 3 conv layers


def _round_up(x, m):
    return ((x + m - 1) // m) * m


def _pgcf_kernel(e_hbm, diag_ref, b_ref, out_ref, acc_ref, feat_ref, dma_sem,
                 *, tm, tk, seg, n_pad, nu_tiles):
    """One grid step of (layer l, row tile i, reduction tile k).

    e_hbm   : (n_pad, d_pad) bf16  padded embedding table, left in HBM (ANY)
    diag_ref: (tm, 1)        f32   self-loop diagonal for this row tile
    b_ref   : (tm, tk)       bf16  streamed off-diagonal adjacency block tile
    out_ref : (tm, d_pad)    f32   output tile (layer slot permuted via out_spec)
    acc_ref : (tm, d_pad)    f32   accumulator scratch
    feat_ref: (2*n_pad, d_pad) bf16 resident per-layer features (double buffer)
    dma_sem : DMA semaphore for the one-time embedding load
    """
    l = pl.program_id(0)
    i = pl.program_id(1)
    k = pl.program_id(2)
    nk = pl.num_programs(2)

    # One-time prologue: DMA the padded bf16 embedding table from HBM straight
    # into layer-buffer 0 of the resident feature scratch (no VMEM->VMEM copy,
    # no resident input block).
    @pl.when((l == 0) & (i == 0) & (k == 0))
    def _():
        cp = pltpu.make_async_copy(
            e_hbm, feat_ref.at[pl.ds(0, n_pad), :], dma_sem)
        cp.start()
        cp.wait()

    buf = (l % 2) * n_pad  # layer l reads buffer l%2, writes buffer (l+1)%2

    # Row tile i belongs to the user block iff i < nu_tiles; its matmul partner
    # features are the *other* block (item features for user rows, vice versa).
    other = jnp.where(i < nu_tiles, seg, 0)
    src_off = pl.multiple_of(buf + other + k * tk, tk)
    f_tile = feat_ref[pl.ds(src_off, tk), :]                 # (tk, d_pad) bf16
    partial = jnp.dot(b_ref[...], f_tile, preferred_element_type=jnp.float32)

    @pl.when(k == 0)
    def _():
        # Fold the diagonal self-loop term and the first partial product into the
        # accumulator write: no zero-init store + reload round trip.
        row_off = pl.multiple_of(buf + i * tm, tm)
        f_rows = feat_ref[pl.ds(row_off, tm), :].astype(jnp.float32)
        acc_ref[...] = diag_ref[...] * f_rows + partial

    @pl.when(k != 0)
    def _():
        acc_ref[...] += partial

    @pl.when(k == nk - 1)
    def _():
        # Store straight to the HBM output (the [2,0,1] layer permutation is
        # materialized by the out_spec column slot).
        out_ref[...] = acc_ref[...]

        # Feed the next layer; the last layer skips this dead cast + store.
        @pl.when(l != N_LAYERS - 1)
        def _():
            dst_off = pl.multiple_of(((l + 1) % 2) * n_pad + i * tm, tm)
            feat_ref[pl.ds(dst_off, tm), :] = acc_ref[...].astype(jnp.bfloat16)


def pgcf_forward(a_norm, emb, *, num_user, num_item, tm=512, tk=1024):
    """Returns (all_feat [N,3,D] reordered by idx=[2,0,1], feat [N,D] = last layer).

    Assumes the PGCF structure: `a_norm` is bipartite (user-item) plus self-loops,
    so its user-user / item-item blocks are purely diagonal.
    """
    n, d = emb.shape
    assert n == num_user + num_item
    assert a_norm.shape == (n, n)

    d_pad = _round_up(d, 128)
    half = max(num_user, num_item)

    # Tile selection: tk a multiple of 128, tm a multiple of 8 that divides tk,
    # so per-block padding is a single round_up (no lcm blow-up).
    tk = min(tk, _round_up(half, 128))
    tm = min(tm, tk)
    tm = max(8, (tm // 8) * 8)
    while tk % tm:
        tm -= 8
    seg = _round_up(half, tk)          # padded size of each (user / item) block
    n_pad = 2 * seg
    nu_tiles = seg // tm               # row tiles 0..nu_tiles-1 are user rows

    bf16, f32 = jnp.bfloat16, jnp.float32

    # Bipartite decomposition: stream only the off-diagonal blocks (packed into a
    # lane-padded (n_pad, seg) slab), apply the diagonal as an in-kernel scale-add.
    # Blocks are cast to bf16 BEFORE assembly -> no n_pad^2 f32 intermediate.
    # (In the real model A changes per forward via node dropout, so this prep
    # stays inside the jitted forward.)
    a_ui = a_norm[:num_user, num_user:].astype(bf16)     # (nu, ni)
    a_iu = a_norm[num_user:, :num_user].astype(bf16)     # (ni, nu)
    b = jnp.zeros((n_pad, seg), bf16)
    b = b.at[:num_user, :num_item].set(a_ui)
    b = b.at[seg:seg + num_item, :num_user].set(a_iu)

    diag = jnp.diagonal(a_norm).astype(bf16).astype(f32)  # same quant as streamed A
    diag_pad = jnp.zeros((n_pad, 1), f32)
    diag_pad = diag_pad.at[:num_user, 0].set(diag[:num_user])
    diag_pad = diag_pad.at[seg:seg + num_item, 0].set(diag[num_user:])

    e_pad = jnp.zeros((n_pad, d_pad), bf16)
    e_pad = e_pad.at[:num_user, :d].set(emb[:num_user].astype(bf16))
    e_pad = e_pad.at[seg:seg + num_item, :d].set(emb[num_user:].astype(bf16))

    grid = (N_LAYERS, n_pad // tm, seg // tk)

    kernel = functools.partial(_pgcf_kernel, tm=tm, tk=tk, seg=seg,
                               n_pad=n_pad, nu_tiles=nu_tiles)

    # VMEM budget derived from the actual buffers (+16 MiB headroom for compiler
    # internals), clamped to stay inside v7x's 64 MiB physical VMEM.
    vmem_need = (2 * n_pad * d_pad * 2      # resident bf16 feature double buffer
                 + tm * d_pad * 4           # f32 accumulator scratch
                 + 2 * tm * tk * 2          # double-buffered streamed B tile
                 + 2 * tm * d_pad * 4       # double-buffered output tile
                 + 2 * tm * 4)              # double-buffered diag tile
    vmem_limit = int(min(vmem_need + (16 << 20), 48 << 20))

    out = pl.pallas_call(
        kernel,
        out_shape=jax.ShapeDtypeStruct((n_pad, N_LAYERS * d_pad), f32),
        grid_spec=pltpu.PrefetchScalarGridSpec(
            num_scalar_prefetch=0,
            grid=grid,
            in_specs=[
                # Embedding: stays in HBM; manually DMA'd once into the scratch.
                pl.BlockSpec(memory_space=pl.ANY),
                # Self-loop diagonal for the current row tile.
                pl.BlockSpec((tm, 1), lambda l, i, k: (i, 0)),
                # Streamed off-diagonal adjacency tiles, pipelined by BlockSpec.
                pl.BlockSpec((tm, tk), lambda l, i, k: (i, k)),
            ],
            # Lane-dense output: layer l goes to column slot (l+1)%3, i.e. the
            # torch idx=[2,0,1] reorder is produced directly by the stores.
            out_specs=pl.BlockSpec(
                (tm, d_pad), lambda l, i, k: (i, (l + 1) % N_LAYERS)),
            scratch_shapes=[
                pltpu.VMEM((tm, d_pad), jnp.float32),          # f32 accumulator
                pltpu.VMEM((2 * n_pad, d_pad), jnp.bfloat16),  # resident features
                pltpu.SemaphoreType.DMA,                       # embedding-load sem
            ],
        ),
        compiler_params=pltpu.CompilerParams(
            # All axes must stay sequential on one core: the resident feature
            # scratch is carried across layers and row tiles.
            dimension_semantics=("arbitrary", "arbitrary", "arbitrary"),
            vmem_limit_bytes=vmem_limit,
        ),
    )(e_pad, diag_pad, b)

    # Free reshape (row-major identical), then undo block-padding of the rows.
    all_pad = out.reshape(n_pad, N_LAYERS, d_pad)
    all_feat = jnp.concatenate(
        [all_pad[:num_user], all_pad[seg:seg + num_item]], axis=0)[:, :, :d]
    # Last layer (original index 2) sits at slot 0 after the [2,0,1] reorder.
    feat = all_feat[:, 0, :]
    return all_feat, feat


def pgcf_forward_ref(a_norm, emb):
    """Pure-JAX reference using the same bf16 operand quantization as the kernel."""
    a = a_norm.astype(jnp.bfloat16).astype(jnp.float32)
    f_bf = emb.astype(jnp.bfloat16)
    outs = []
    for _ in range(N_LAYERS):
        o = jnp.dot(a, f_bf.astype(jnp.float32), precision=jax.lax.Precision.HIGHEST)
        outs.append(o)
        f_bf = o.astype(jnp.bfloat16)
    all_feat = jnp.stack(outs, axis=1)[:, jnp.array([2, 0, 1]), :]
    return all_feat, outs[-1]


def build_normalized_adj(num_user, num_item):
    """Glue: deterministic synthetic bipartite graph -> self-loop -> 'bi' norm."""
    n = num_user + num_item
    u = jnp.arange(num_user)
    it = jnp.arange(num_item)
    inter = ((u[:, None] + 2 * it[None, :]) % 3 == 0).astype(jnp.float32)
    a = jnp.zeros((n, n), jnp.float32)
    a = a.at[:num_user, num_user:].set(inter)
    a = a.at[num_user:, :num_user].set(inter.T)
    a = a + jnp.eye(n, dtype=jnp.float32)  # Utils.add_self_loop
    deg = a.sum(axis=1)
    d_inv_sqrt = jnp.where(deg > 0.0, 1.0 / jnp.sqrt(deg), 0.0)
    a_norm = d_inv_sqrt[:, None] * a * d_inv_sqrt[None, :]  # Utils.norm(..., 'bi')
    return a_norm


def _run_case(num_user, num_item, dim, tm, tk):
    n = num_user + num_item
    key = jax.random.PRNGKey(0)
    # nn.init.normal_(self.E.weight, std=0.01)
    emb = 0.01 * jax.random.normal(key, (n, dim), dtype=jnp.float32)
    a_norm = build_normalized_adj(num_user, num_item)

    fwd = jax.jit(functools.partial(
        pgcf_forward, num_user=num_user, num_item=num_item, tm=tm, tk=tk))
    all_feat, feat = fwd(a_norm, emb)
    jax.block_until_ready((all_feat, feat))

    assert all_feat.shape == (n, N_LAYERS, dim)
    assert feat.shape == (n, dim)
    # Last layer sits at slot 0 of the [2,0,1]-permuted stack.
    assert bool(jnp.allclose(all_feat[:, 0, :], feat))

    all_ref, feat_ref = pgcf_forward_ref(a_norm, emb)
    assert bool(jnp.allclose(all_feat, all_ref, rtol=1e-2, atol=1e-5))
    assert bool(jnp.allclose(feat, feat_ref, rtol=1e-2, atol=1e-5))


if __name__ == "__main__":
    # Tiny sanity case (tiles clamp to 128/128; 1 user row tile, 1 item row tile).
    _run_case(num_user=8, num_item=8, dim=32, tm=512, tk=1024)
    # Multi-tile case: n > tile sizes, multiple k tiles, d not a multiple of 128,
    # exercises row/column padding, block selection and the layer permutation.
    _run_case(num_user=300, num_item=260, dim=96, tm=128, tk=256)
    print("KERNEL_OK")
</pallas_src>

<mosaic_0001>
module attributes {stable_mosaic.version = 11 : i64} {
  func.func @_pgcf_kernel(%arg0: i32, %arg1: i32, %arg2: i32, %arg3: memref<256x128xbf16, #tpu.memory_space<any>>, %arg4: memref<128x1xf32, #tpu.memory_space<vmem>>, %arg5: memref<128x128xbf16, #tpu.memory_space<vmem>>, %arg6: memref<128x128xf32, #tpu.memory_space<vmem>>, %arg7: memref<128x128xf32, #tpu.memory_space<vmem>>, %arg8: memref<512x128xbf16, #tpu.memory_space<vmem>>, %arg9: memref<!tpu.dma_semaphore, #tpu.memory_space<semaphore_mem>>) attributes {dimension_semantics = [#tpu.dimension_semantics<arbitrary>, #tpu.dimension_semantics<arbitrary>, #tpu.dimension_semantics<arbitrary>], iteration_bounds = array<i64: 3, 2, 1>, scalar_prefetch = 0 : i64, scratch_operands = 3 : i64, tpu.core_type = #tpu.core_type<tc>, window_params = [{}, {transform_indices = @transform_1, window_bounds = array<i64: 128, 1>}, {transform_indices = @transform_2, window_bounds = array<i64: 128, 128>}, {transform_indices = @transform_3, window_bounds = array<i64: 128, 128>}]} {
    %c0_i32 = arith.constant 0 : i32
    %0 = arith.cmpi eq, %arg0, %c0_i32 : i32
    %c0_i32_0 = arith.constant 0 : i32
    %1 = arith.cmpi eq, %arg1, %c0_i32_0 : i32
    %2 = arith.andi %0, %1 : i1
    %c0_i32_1 = arith.constant 0 : i32
    %3 = arith.cmpi eq, %arg2, %c0_i32_1 : i32
    %4 = arith.andi %2, %3 : i1
    %5 = arith.extui %4 : i1 to i32
    %c0_i32_2 = arith.constant 0 : i32
    %6 = arith.cmpi ne, %5, %c0_i32_2 : i32
    scf.if %6 {
      %c0_i32_18 = arith.constant 0 : i32
      %c0_i32_19 = arith.constant 0 : i32
      %37 = tpu.memref_slice %arg8[%c0_i32_18, %c0_i32_19] : memref<512x128xbf16, #tpu.memory_space<vmem>> -> memref<256x128xbf16, #tpu.memory_space<vmem>>
      tpu.enqueue_dma source(%arg3 : memref<256x128xbf16, #tpu.memory_space<any>>) target(%37 : memref<256x128xbf16, #tpu.memory_space<vmem>>) target_semaphore(%arg9 : memref<!tpu.dma_semaphore, #tpu.memory_space<semaphore_mem>>)
      %c0_i32_20 = arith.constant 0 : i32
      %c0_i32_21 = arith.constant 0 : i32
      %38 = tpu.memref_slice %arg8[%c0_i32_20, %c0_i32_21] : memref<512x128xbf16, #tpu.memory_space<vmem>> -> memref<256x128xbf16, #tpu.memory_space<vmem>>
      tpu.wait_dma2 semaphore(%arg9 : memref<!tpu.dma_semaphore, #tpu.memory_space<semaphore_mem>>) src(%arg3 : memref<256x128xbf16, #tpu.memory_space<any>>) dst(%38 : memref<256x128xbf16, #tpu.memory_space<vmem>>)
    } else {
    }
    %c2_i32 = arith.constant 2 : i32
    %c0_i32_3 = arith.constant 0 : i32
    %7 = arith.cmpi eq, %c2_i32, %c0_i32_3 : i32
    %c1_i32 = arith.constant 1 : i32
    %8 = arith.select %7, %c1_i32, %c2_i32 : i32
    %9 = arith.remsi %arg0, %8 : i32
    %c0_i32_4 = arith.constant 0 : i32
    %10 = arith.cmpi ne, %9, %c0_i32_4 : i32
    %c0_i32_5 = arith.constant 0 : i32
    %11 = arith.cmpi slt, %9, %c0_i32_5 : i32
    %c0_i32_6 = arith.constant 0 : i32
    %12 = arith.cmpi slt, %8, %c0_i32_6 : i32
    %13 = arith.xori %11, %12 : i1
    %14 = arith.andi %13, %10 : i1
    %15 = arith.addi %9, %8 : i32
    %16 = arith.select %14, %15, %9 : i32
    %c256_i32 = arith.constant 256 : i32
    %17 = arith.muli %16, %c256_i32 : i32
    %c1_i32_7 = arith.constant 1 : i32
    %18 = arith.cmpi slt, %arg1, %c1_i32_7 : i32
    %c128_i32 = arith.constant 128 : i32
    %c0_i32_8 = arith.constant 0 : i32
    %19 = arith.select %18, %c128_i32, %c0_i32_8 : i32
    %20 = arith.addi %17, %19 : i32
    %c128_i32_9 = arith.constant 128 : i32
    %21 = arith.muli %arg2, %c128_i32_9 : i32
    %22 = arith.addi %20, %21 : i32
    %23 = tpu.assume_multiple %22, 128 : i32
    %24 = arith.index_cast %23 : i32 to index
    %c0 = arith.constant 0 : index
    %25 = vector.load %arg8[%24, %c0] : memref<512x128xbf16, #tpu.memory_space<vmem>>, vector<128x128xbf16>
    %c0_10 = arith.constant 0 : index
    %c0_11 = arith.constant 0 : index
    %26 = vector.load %arg5[%c0_10, %c0_11] : memref<128x128xbf16, #tpu.memory_space<vmem>>, vector<128x128xbf16>
    %cst = arith.constant dense<0.000000e+00> : vector<128x128xf32>
    %27 = tpu.matmul %26, %25, %cst {dimension_numbers = #tpu.dot_dimension_numbers<[1], [0], [0], [1], [0, 0, 1, 1], [], []>} : vector<128x128xbf16>, vector<128x128xbf16>, vector<128x128xf32> -> vector<128x128xf32>
    %c0_i32_12 = arith.constant 0 : i32
    %28 = arith.cmpi eq, %arg2, %c0_i32_12 : i32
    %29 = arith.extui %28 : i1 to i32
    %c0_i32_13 = arith.constant 0 : i32
    %30 = arith.cmpi ne, %29, %c0_i32_13 : i32
    scf.if %30 {
      %c128_i32_18 = arith.constant 128 : i32
      %37 = arith.muli %arg1, %c128_i32_18 : i32
      %38 = arith.addi %17, %37 : i32
      %39 = tpu.assume_multiple %38, 128 : i32
      %40 = arith.index_cast %39 : i32 to index
      %c0_19 = arith.constant 0 : index
      %41 = vector.load %arg8[%40, %c0_19] : memref<512x128xbf16, #tpu.memory_space<vmem>>, vector<128x128xbf16>
      %42 = arith.extf %41 : vector<128x128xbf16> to vector<128x128xf32>
      %c0_20 = arith.constant 0 : index
      %c0_21 = arith.constant 0 : index
      %43 = vector.load %arg4[%c0_20, %c0_21] : memref<128x1xf32, #tpu.memory_space<vmem>>, vector<128x1xf32>
      %44 = vector.broadcast %43 : vector<128x1xf32> to vector<128x128xf32>
      %45 = arith.mulf %44, %42 : vector<128x128xf32>
      %46 = arith.addf %45, %27 : vector<128x128xf32>
      %c0_22 = arith.constant 0 : index
      %c0_23 = arith.constant 0 : index
      %47 = vector.load %arg7[%c0_22, %c0_23] : memref<128x128xf32, #tpu.memory_space<vmem>>, vector<128x128xf32>
      tpu.vector_store %arg7[%c0_22, %c0_23], %46 {strides = array<i32>} : memref<128x128xf32, #tpu.memory_space<vmem>>, vector<128x128xf32>,
    } else {
    }
    %c0_i32_14 = arith.constant 0 : i32
    %31 = arith.cmpi ne, %arg2, %c0_i32_14 : i32
    %32 = arith.extui %31 : i1 to i32
    %c0_i32_15 = arith.constant 0 : i32
    %33 = arith.cmpi ne, %32, %c0_i32_15 : i32
    scf.if %33 {
      %c0_18 = arith.constant 0 : index
      %c0_19 = arith.constant 0 : index
      %37 = vector.load %arg7[%c0_18, %c0_19] : memref<128x128xf32, #tpu.memory_space<vmem>>, vector<128x128xf32>
      %38 = arith.addf %37, %27 : vector<128x128xf32>
      %c0_20 = arith.constant 0 : index
      %c0_21 = arith.constant 0 : index
      %39 = vector.load %arg7[%c0_20, %c0_21] : memref<128x128xf32, #tpu.memory_space<vmem>>, vector<128x128xf32>
      tpu.vector_store %arg7[%c0_20, %c0_21], %38 {strides = array<i32>} : memref<128x128xf32, #tpu.memory_space<vmem>>, vector<128x128xf32>,
    } else {
    }
    %c0_i32_16 = arith.constant 0 : i32
    %34 = arith.cmpi eq, %arg2, %c0_i32_16 : i32
    %35 = arith.extui %34 : i1 to i32
    %c0_i32_17 = arith.constant 0 : i32
    %36 = arith.cmpi ne, %35, %c0_i32_17 : i32
    scf.if %36 {
      %c0_18 = arith.constant 0 : index
      %c0_19 = arith.constant 0 : index
      %37 = vector.load %arg7[%c0_18, %c0_19] : memref<128x128xf32, #tpu.memory_space<vmem>>, vector<128x128xf32>
      %c0_20 = arith.constant 0 : index
      %c0_21 = arith.constant 0 : index
      %38 = vector.load %arg6[%c0_20, %c0_21] : memref<128x128xf32, #tpu.memory_space<vmem>>, vector<128x128xf32>
      tpu.vector_store %arg6[%c0_20, %c0_21], %37 {strides = array<i32>} : memref<128x128xf32, #tpu.memory_space<vmem>>, vector<128x128xf32>,
      %c2_i32_22 = arith.constant 2 : i32
      %39 = arith.cmpi ne, %arg0, %c2_i32_22 : i32
      %40 = arith.extui %39 : i1 to i32
      %c0_i32_23 = arith.constant 0 : i32
      %41 = arith.cmpi ne, %40, %c0_i32_23 : i32
      scf.if %41 {
        %c1_i32_24 = arith.constant 1 : i32
        %42 = arith.addi %arg0, %c1_i32_24 : i32
        %c2_i32_25 = arith.constant 2 : i32
        %c0_i32_26 = arith.constant 0 : i32
        %43 = arith.cmpi eq, %c2_i32_25, %c0_i32_26 : i32
        %c1_i32_27 = arith.constant 1 : i32
        %44 = arith.select %43, %c1_i32_27, %c2_i32_25 : i32
        %45 = arith.remsi %42, %44 : i32
        %c0_i32_28 = arith.constant 0 : i32
        %46 = arith.cmpi ne, %45, %c0_i32_28 : i32
        %c0_i32_29 = arith.constant 0 : i32
        %47 = arith.cmpi slt, %45, %c0_i32_29 : i32
        %c0_i32_30 = arith.constant 0 : i32
        %48 = arith.cmpi slt, %44, %c0_i32_30 : i32
        %49 = arith.xori %47, %48 : i1
        %50 = arith.andi %49, %46 : i1
        %51 = arith.addi %45, %44 : i32
        %52 = arith.select %50, %51, %45 : i32
        %c256_i32_31 = arith.constant 256 : i32
        %53 = arith.muli %52, %c256_i32_31 : i32
        %c128_i32_32 = arith.constant 128 : i32
        %54 = arith.muli %arg1, %c128_i32_32 : i32
        %55 = arith.addi %53, %54 : i32
        %56 = tpu.assume_multiple %55, 128 : i32
        %c0_33 = arith.constant 0 : index
        %c0_34 = arith.constant 0 : index
        %57 = vector.load %arg7[%c0_33, %c0_34] : memref<128x128xf32, #tpu.memory_space<vmem>>, vector<128x128xf32>
        %58 = arith.truncf %57 : vector<128x128xf32> to vector<128x128xbf16>
        %59 = arith.index_cast %56 : i32 to index
        %c0_35 = arith.constant 0 : index
        %60 = vector.load %arg8[%59, %c0_35] : memref<512x128xbf16, #tpu.memory_space<vmem>>, vector<128x128xbf16>
        tpu.vector_store %arg8[%59, %c0_35], %58 {strides = array<i32>} : memref<512x128xbf16, #tpu.memory_space<vmem>>, vector<128x128xbf16>,
      } else {
      }
    } else {
    }
    return
  }
  func.func @transform_1(%arg0: i32, %arg1: i32, %arg2: i32) -> (i32, i32) {
    %c0_i32 = arith.constant 0 : i32
    %c0_i32_0 = arith.constant 0 : i32
    return %arg1, %c0_i32 : i32, i32
  }
  func.func @transform_2(%arg0: i32, %arg1: i32, %arg2: i32) -> (i32, i32) {
    %c0_i32 = arith.constant 0 : i32
    return %arg1, %arg2 : i32, i32
  }
  func.func @transform_3(%arg0: i32, %arg1: i32, %arg2: i32) -> (i32, i32) {
    %c1_i32 = arith.constant 1 : i32
    %0 = arith.addi %arg0, %c1_i32 : i32
    %c3_i32 = arith.constant 3 : i32
    %c0_i32 = arith.constant 0 : i32
    %1 = arith.cmpi eq, %c3_i32, %c0_i32 : i32
    %c1_i32_0 = arith.constant 1 : i32
    %2 = arith.select %1, %c1_i32_0, %c3_i32 : i32
    %3 = arith.remsi %0, %2 : i32
    %c0_i32_1 = arith.constant 0 : i32
    %4 = arith.cmpi ne, %3, %c0_i32_1 : i32
    %c0_i32_2 = arith.constant 0 : i32
    %5 = arith.cmpi slt, %3, %c0_i32_2 : i32
    %c0_i32_3 = arith.constant 0 : i32
    %6 = arith.cmpi slt, %2, %c0_i32_3 : i32
    %7 = arith.xori %5, %6 : i1
    %8 = arith.andi %7, %4 : i1
    %9 = arith.addi %3, %2 : i32
    %10 = arith.select %8, %9, %3 : i32
    %c0_i32_4 = arith.constant 0 : i32
    return %arg1, %10 : i32, i32
  }
}

</mosaic_0001>

<llo_original>
// kernel: pgcf_forward.1
$region0: #{pgcf_forward.1}
  #allocation0 [shape = 'u32[]', space=smem, size = 0x4, offset = 0x4, fixed_abs, tag = 'smem constant byte address 0x4 - core index']
  #allocation1 [shape = 'u32[144,128]{1,0:T(1,128)}', space=vmem, size = 0x12000, scoped, tag = 'internal scratch']
  #allocation2 [shape = 'f32[128,128]{1,0:T(8,128)}', space=vmem, size = 0x10000, scoped, tag = 'scratch operand']
  #allocation3 [shape = 'bf16[512,128]{1,0:T(16,128)(2,1)}', space=vmem, size = 0x20000, scoped, tag = 'scratch operand']
  #allocation4 [shape = 's32[1]{0}', space=sflag, size = 0x4, scoped, tag = 'scratch operand']
  #allocation6 [shape = 's32[]', space=sflag, size = 0x4, offset = 0, fixed_abs, tag = 'sflag constant byte address 0x0 - dummy sync flag']
  %s0 = inlined_call_operand.vmem [shape: bf16[256,128], index: 0, kind: input, shape index: {}]
  %s1 = inlined_call_operand.vmem [shape: f32[256,1], index: 1, kind: input, shape index: {}]
  %s2 = inlined_call_operand.vmem [shape: bf16[256,128], index: 2, kind: input, shape index: {}]
  %s3 = inlined_call_operand.vmem [shape: f32[256,384], index: 3, kind: output, shape index: {}]
  %s4 = sld [smem:[#allocation0]]
  $region129: #{pgcf_forward.1} parent=0
    _
  %s6 = ssub.s32 1, %s4
  %s7 = scalar_select 0, %s6, %s4
  $region1: #{pgcf_forward.1} parent=0
    #allocation5 [shape = 'u8[131072]{0}', space=vmem, size = 0x20000, scoped, tag = 'output window, operand 0']
    loop: start=0, step=1, limit=8
    $region2: #{pgcf_forward.1} parent=1 // loop_pre_header
      _
    $region3: #{pgcf_forward.1} parent=1 // loop_header
      %s9 = sphi 0, %s13
      %p10 = scmp.ge.s32.totalorder %s9, 8
      %s16 = sphi 0, %s35
      %s17 = sphi 0, %s31
      %s18 = sphi 0, %s27
      %s19 = sphi 0, %s16
      %s20 = sphi 0, %s17
      %s21 = sphi 0, %s18
      %s22 = sphi 0, %s19
      %s23 = sphi 0, %s20
      %s24 = sphi 0, %s21
      %s38 = sphi 0, %s40
      %s41 = sphi 0, %s38
      %s42 = sphi 0, %s41
      %s58 = sphi 0, %s42
      %s66 = sphi 0, %s68
      %s69 = sphi 0, %s66
      %s70 = sphi 0, %s69
      %s86 = sphi 0, %s70
      %s122 = sphi 0, %s124
      %s125 = sphi 0, %s122
      %s126 = sphi 0, %s125
      %s142 = sphi 0, %s126
    $region4: #{pgcf_forward.1} parent=1 // loop_header_branch
      %12 = sbr.rel (%p10) target = $region8
    $region5: #{pgcf_forward.1} parent=1 // loop_body
      %s14 = ssub.s32 %s9, 1
      %s15 = ssub.s32 %s9, 2
      %s25 = sadd.s32 1, %s18
      %p26 = scmp.ge.s32.totalorder %s25, 1
      %s27 = scalar_select %p26, 0, %s25
      %s28 = sadd.s32 1, %s17
      %s29 = scalar_select %p26, %s28, %s17
      %p30 = scmp.ge.s32.totalorder %s29, 2
      %s31 = scalar_select %p30, 0, %s29
      %s32 = sadd.s32 1, %s16
      %s33 = scalar_select %p30, %s32, %s16
      %p34 = scmp.ge.s32.totalorder %s33, 3
      %s35 = scalar_select %p34, 0, %s33
      %s36 = ssub.s32 %s17, %s31
      %p37 = scmp.eq.s32.totalorder %s36, 0
      %s39 = sadd.s32 %s38, 1
      %s40 = scalar_select %p37, %s38, %s39
      %p43 = pneg %p37
      %p44 = scmp.eq.s32.totalorder %s9, 5
      %p45 = por %p43, %p44
      %p46 = scmp.ne.s32.totalorder %s38, %s41
      %p47 = scmp.eq.s32.totalorder %s9, 0
      %p48 = por %p46, %p47
      %p49 = scmp.ne.s32.totalorder %s38, %s41
      %p50 = scmp.eq.s32.totalorder %s14, 5
      %p51 = por %p49, %p50
      %p52 = scmp.ne.s32.totalorder %s41, %s42
      %p53 = scmp.eq.s32.totalorder %s14, 0
      %p54 = por %p52, %p53
      %p55 = scmp.ne.s32.totalorder %s41, %s42
      %p56 = scmp.eq.s32.totalorder %s15, 5
      %p57 = por %p55, %p56
      %p59 = scmp.ne.s32.totalorder %s42, %s58
      %p60 = scmp.eq.s32.totalorder %s15, 0
      %p61 = por %p59, %p60
      %s62 = ssub.s32 %s17, %s31
      %s63 = ssub.s32 %s18, %s27
      %s64 = sor.u32 %s62, %s63
      %p65 = scmp.eq.s32.totalorder %s64, 0
      %s67 = sadd.s32 %s66, 1
      %s68 = scalar_select %p65, %s66, %s67
      %p71 = pneg %p65
      %p72 = scmp.eq.s32.totalorder %s9, 5
      %p73 = por %p71, %p72
      %p74 = scmp.ne.s32.totalorder %s66, %s69
      %p75 = scmp.eq.s32.totalorder %s9, 0
      %p76 = por %p74, %p75
      %p77 = scmp.ne.s32.totalorder %s66, %s69
      %p78 = scmp.eq.s32.totalorder %s14, 5
      %p79 = por %p77, %p78
      %p80 = scmp.ne.s32.totalorder %s69, %s70
      %p81 = scmp.eq.s32.totalorder %s14, 0
      %p82 = por %p80, %p81
      %p83 = scmp.ne.s32.totalorder %s69, %s70
      %p84 = scmp.eq.s32.totalorder %s15, 5
      %p85 = por %p83, %p84
      %p87 = scmp.ne.s32.totalorder %s70, %s86
      %p88 = scmp.eq.s32.totalorder %s15, 0
      %p89 = por %p87, %p88
      %s90 = sadd.s32 %s16, 1
      %p91 = scmp.lt.s32.totalorder %s90, 0
      %s92 = ssub.s32 0, %s90
      %s93 = scalar_select %p91, %s92, %s90
      %s94 = sdiv.u32.pop %s93, 3
      %s95 = srem.u32.pop %s93, 3
      %s96 = ssub.s32 0, %s95
      %s97 = scalar_select %p91, %s96, %s95
      %p98 = scmp.ne.s32.totalorder %s97, 0
      %p99 = scmp.lt.s32.totalorder %s97, 0
      %p100 = pnand %p99, %p98
      %p101 = pneg %p100
      %s102 = sadd.s32 %s97, 3
      %s103 = scalar_select %p101, %s102, %s97
      %s104 = sadd.s32 %s35, 1
      %p105 = scmp.lt.s32.totalorder %s104, 0
      %s106 = ssub.s32 0, %s104
      %s107 = scalar_select %p105, %s106, %s104
      %s108 = sdiv.u32.pop %s107, 3
      %s109 = srem.u32.pop %s107, 3
      %s110 = ssub.s32 0, %s109
      %s111 = scalar_select %p105, %s110, %s109
      %p112 = scmp.ne.s32.totalorder %s111, 0
      %p113 = scmp.lt.s32.totalorder %s111, 0
      %p114 = pnand %p113, %p112
      %p115 = pneg %p114
      %s116 = sadd.s32 %s111, 3
      %s117 = scalar_select %p115, %s116, %s111
      %s118 = ssub.s32 %s17, %s31
      %s119 = ssub.s32 %s103, %s117
      %s120 = sor.u32 %s118, %s119
      %p121 = scmp.eq.s32.totalorder %s120, 0
      %s123 = sadd.s32 %s122, 1
      %s124 = scalar_select %p121, %s122, %s123
      %p127 = pneg %p121
      %p128 = scmp.eq.s32.totalorder %s9, 5
      %p129 = por %p127, %p128
      %p130 = scmp.ne.s32.totalorder %s122, %s125
      %p131 = scmp.eq.s32.totalorder %s9, 0
      %p132 = por %p130, %p131
      %p133 = scmp.ne.s32.totalorder %s122, %s125
      %p134 = scmp.eq.s32.totalorder %s14, 5
      %p135 = por %p133, %p134
      %p136 = scmp.ne.s32.totalorder %s125, %s126
      %p137 = scmp.eq.s32.totalorder %s14, 0
      %p138 = por %p136, %p137
      %p139 = scmp.ne.s32.totalorder %s125, %s126
      %p140 = scmp.eq.s32.totalorder %s15, 5
      %p141 = por %p139, %p140
      %p143 = scmp.ne.s32.totalorder %s126, %s142
      %p144 = scmp.eq.s32.totalorder %s15, 0
      %p145 = por %p143, %p144
      %p146 = scmp.le.s32.totalorder 1, %s9
      %p147 = scmp.lt.s32.totalorder %s9, 7
      %p148 = pnand %p146, %p147
      %p149 = pneg %p148
      // Predicated region
      $region9: #{pgcf_forward.1} parent=5 // pred_check
        _
      $region10: #{pgcf_forward.1} parent=5 // pred_check_branch
        %151 = sbr.rel (%p148) target = $region12
      $region11: #{pgcf_forward.1} parent=5 // pred_region
        %s152 = ssub.s32 %s9, 1
      $region12: #{pgcf_forward.1} parent=5 // pred_fallthru
        _
      %p153 = scmp.lt.s32.totalorder %s9, 6
      // Predicated region
      $region13: #{pgcf_forward.1} parent=5 // pred_check
        %p154 = pneg %p153
      $region14: #{pgcf_forward.1} parent=5 // pred_check_branch
        %156 = sbr.rel (%p154) target = $region16
      $region15: #{pgcf_forward.1} parent=5 // pred_region
        // Predicated region
        $region17: #{pgcf_forward.1} parent=15 // pred_check
          %p157 = pneg %p48
        $region18: #{pgcf_forward.1} parent=15 // pred_check_branch
          %159 = sbr.rel (%p157) target = $region20
        $region19: #{pgcf_forward.1} parent=15 // pred_region
          %s160 = smul.u32 16, %s17
          %p161 = scmp.lt.s32.totalorder %s160, 31
          %s162 = scalar_select %p161, %s160, 31
          %s163 = smul.addr %s162, 8
          %s164 = scalar_lea.vmem %s1, %s163
          %s165 = smul.u32 16, %s17
        $region20: #{pgcf_forward.1} parent=15 // pred_fallthru
          _
        // Predicated region
        $region21: #{pgcf_forward.1} parent=15 // pred_check
          %p166 = pneg %p76
        $region22: #{pgcf_forward.1} parent=15 // pred_check_branch
          %168 = sbr.rel (%p166) target = $region24
        $region23: #{pgcf_forward.1} parent=15 // pred_region
          %s169 = smul.u32 16, %s17
          %p170 = scmp.lt.s32.totalorder %s169, 31
          %s171 = scalar_select %p170, %s169, 31
          %p172 = scmp.lt.s32.totalorder %s18, 0
          %s173 = scalar_select %p172, %s18, 0
          %s174 = sadd.s32 %s173, %s171
          %s175 = smul.addr %s174, 4
          %s176 = scalar_lea.vmem %s2, %s175
          %s177 = smul.u32 16, %s17
        $region24: #{pgcf_forward.1} parent=15 // pred_fallthru
          _
      $region16: #{pgcf_forward.1} parent=5 // pred_fallthru
        _
      %p178 = scmp.le.s32.totalorder 1, %s9
      %p179 = scmp.lt.s32.totalorder %s9, 7
      %p180 = pnand %p178, %p179
      %p181 = pneg %p180
      // Predicated region
      $region25: #{pgcf_forward.1} parent=5 // pred_check
        _
      $region26: #{pgcf_forward.1} parent=5 // pred_check_branch
        %183 = sbr.rel (%p180) target = $region28
      $region27: #{pgcf_forward.1} parent=5 // pred_region
        %s184 = ssub.s32 %s9, 1
        %s185 = smul.u32 16, %s20
        %p186 = scmp.lt.s32.totalorder %s185, 31
        %s187 = scalar_select %p186, %s185, 31
        %s188 = smul.addr %s187, 8
        %s189 = scalar_lea.vmem %s1, %s188
        %p190 = pneg %p54
        %p191 = pneg %p51
        %s192 = smul.u32 16, %s20
        %p193 = scmp.lt.s32.totalorder %s192, 31
        %s194 = scalar_select %p193, %s192, 31
        %p195 = scmp.lt.s32.totalorder %s21, 0
        %s196 = scalar_select %p195, %s21, 0
        %s197 = sadd.s32 %s196, %s194
        %s198 = smul.addr %s197, 4
        %s199 = scalar_lea.vmem %s2, %s198
        %p200 = pneg %p82
        %p201 = pneg %p79
        %p202 = pneg %p138
        %p203 = pneg %p135
        %s204 = sand.u32 %s125, 1
        %s205 = sand.u32 %s125, 1
        %s206 = smul.addr %s205, 128
        %s207 = scalar_lea.vmem [#allocation5], %s206
        %s208 = smul.u32 16, %s20
        %p209 = scmp.lt.s32.totalorder %s208, 31
        %s210 = scalar_select %p209, %s208, 31
        %s211 = smul.addr %s210, 8
        %s212 = scalar_lea.vmem %s1, %s211
        %s213 = smul.u32 16, %s20
        %s214 = smul.u32 16, %s20
        %p215 = scmp.lt.s32.totalorder %s214, 31
        %s216 = scalar_select %p215, %s214, 31
        %p217 = scmp.lt.s32.totalorder %s21, 0
        %s218 = scalar_select %p217, %s21, 0
        %s219 = sadd.s32 %s218, %s216
        %s220 = smul.addr %s219, 4
        %s221 = scalar_lea.vmem %s2, %s220
        %s222 = smul.u32 16, %s20
        %s223 = sadd.s32 %s19, 1
        %p224 = scmp.lt.s32.totalorder %s223, 0
        %s225 = ssub.s32 0, %s223
        %s226 = scalar_select %p224, %s225, %s223
        %s227 = sdiv.u32.pop %s226, 3
        %s228 = srem.u32.pop %s226, 3
        %s229 = ssub.s32 0, %s228
        %s230 = scalar_select %p224, %s229, %s228
        %p231 = scmp.ne.s32.totalorder %s230, 0
        %p232 = scmp.lt.s32.totalorder %s230, 0
        %p233 = pnand %p232, %p231
        %p234 = pneg %p233
        %s235 = sadd.s32 %s230, 3
        %s236 = scalar_select %p234, %s235, %s230
        %s237 = smul.u32 16, %s20
        %p239 = scmp.eq.s32.totalorder %s19, 0
        %p240 = scmp.eq.s32.totalorder %s20, 0
        %p241 = pnand %p239, %p240
        %p242 = pneg %p241
        %p243 = scmp.eq.s32.totalorder %s21, 0
        %p244 = pnand %p242, %p243
        %p245 = pneg %p244
        // Predicated region
        $region29: #{pgcf_forward.1} parent=27 // pred_check
          _
        $region30: #{pgcf_forward.1} parent=27 // pred_check_branch
          %247 = sbr.rel (%p244) target = $region32
        $region31: #{pgcf_forward.1} parent=27 // pred_region
          %p249 = scmp.lt.u32.totalorder 128, 8
          %p250 = pneg %p249
          // Predicated region
          $region33: #{pgcf_forward.1} parent=31 // pred_check
            _
          $region34: #{pgcf_forward.1} parent=31 // pred_check_branch
            %252 = sbr.rel (%p249) target = $region36
          $region35: #{pgcf_forward.1} parent=31 // pred_region
            %s267 = sand.u32 128, 7
            %p268 = scmp.eq.s32.totalorder %s267, 0
            // Predicated region
            $region48: #{pgcf_forward.1} parent=35 // pred_check
              %p269 = pneg %p268
            $region49: #{pgcf_forward.1} parent=35 // pred_check_branch
              %271 = sbr.rel (%p269) target = $region51
            $region50: #{pgcf_forward.1} parent=35 // pred_region
              loop: start=0, step=1, limit=1
              $region52: #{pgcf_forward.1} parent=50 // loop_pre_header
                _
              $region53: #{pgcf_forward.1} parent=50 // loop_header
                %s273 = sphi 0, %s277
                %p274 = scmp.ge.s32.totalorder %s273, 1
                %s278 = sphi %s0, %s0
                %s279 = sphi [#allocation3], [#allocation3]
              $region54: #{pgcf_forward.1} parent=50 // loop_header_branch
                %276 = sbr.rel (%p274) target = $region58
              $region55: #{pgcf_forward.1} parent=50 // loop_body
                %v280 = vld [vmem:[%s278] sm:$0xff]
                %281 = vst [vmem:[%s279] sm:$0xff] %v280
                %v282 = vld [vmem:[%s278 + $0x8] sm:$0xff]
                %283 = vst [vmem:[%s279 + $0x8] sm:$0xff] %v282
                %v284 = vld [vmem:[%s278 + $0x10] sm:$0xff]
                %285 = vst [vmem:[%s279 + $0x10] sm:$0xff] %v284
                %v286 = vld [vmem:[%s278 + $0x18] sm:$0xff]
                %287 = vst [vmem:[%s279 + $0x18] sm:$0xff] %v286
                %v288 = vld [vmem:[%s278 + $0x20] sm:$0xff]
                %289 = vst [vmem:[%s279 + $0x20] sm:$0xff] %v288
                %v290 = vld [vmem:[%s278 + $0x28] sm:$0xff]
                %291 = vst [vmem:[%s279 + $0x28] sm:$0xff] %v290
                %v292 = vld [vmem:[%s278 + $0x30] sm:$0xff]
                %293 = vst [vmem:[%s279 + $0x30] sm:$0xff] %v292
                %v294 = vld [vmem:[%s278 + $0x38] sm:$0xff]
                %295 = vst [vmem:[%s279 + $0x38] sm:$0xff] %v294
                %v296 = vld [vmem:[%s278 + $0x40] sm:$0xff]
                %297 = vst [vmem:[%s279 + $0x40] sm:$0xff] %v296
                %v298 = vld [vmem:[%s278 + $0x48] sm:$0xff]
                %299 = vst [vmem:[%s279 + $0x48] sm:$0xff] %v298
                %v300 = vld [vmem:[%s278 + $0x50] sm:$0xff]
                %301 = vst [vmem:[%s279 + $0x50] sm:$0xff] %v300
                %v302 = vld [vmem:[%s278 + $0x58] sm:$0xff]
                %303 = vst [vmem:[%s279 + $0x58] sm:$0xff] %v302
                %v304 = vld [vmem:[%s278 + $0x60] sm:$0xff]
                %305 = vst [vmem:[%s279 + $0x60] sm:$0xff] %v304
                %v306 = vld [vmem:[%s278 + $0x68] sm:$0xff]
                %307 = vst [vmem:[%s279 + $0x68] sm:$0xff] %v306
                %v308 = vld [vmem:[%s278 + $0x70] sm:$0xff]
                %309 = vst [vmem:[%s279 + $0x70] sm:$0xff] %v308
                %v310 = vld [vmem:[%s278 + $0x78] sm:$0xff]
                %311 = vst [vmem:[%s279 + $0x78] sm:$0xff] %v310
              $region56: #{pgcf_forward.1} parent=50 // loop_footer
                %s277 = sadd.s32 1, %s273
              $region57: #{pgcf_forward.1} parent=50 // loop_footer_branch
                %272 = sbr.rel target = $region53
              $region58: #{pgcf_forward.1} parent=50 // loop_exit
                _
            $region51: #{pgcf_forward.1} parent=35 // pred_fallthru
              _
            %p312 = pneg %p268
            // Predicated region
            $region59: #{pgcf_forward.1} parent=35 // pred_check
              _
            $region60: #{pgcf_forward.1} parent=35 // pred_check_branch
              %314 = sbr.rel (%p268) target = $region62
            $region61: #{pgcf_forward.1} parent=35 // pred_region
              %s315 = sand.u32 128, 7
            $region62: #{pgcf_forward.1} parent=35 // pred_fallthru
              _
          $region36: #{pgcf_forward.1} parent=31 // pred_fallthru
            _
          // Predicated region
          $region37: #{pgcf_forward.1} parent=31 // pred_check
            %p253 = pneg %p249
          $region38: #{pgcf_forward.1} parent=31 // pred_check_branch
            %255 = sbr.rel (%p253) target = $region40
          $region39: #{pgcf_forward.1} parent=31 // pred_region
            %s256 = sshllo.u32 0, 128
            loop: start=0, step=1, limit=1
            $region41: #{pgcf_forward.1} parent=39 // loop_pre_header
              _
            $region42: #{pgcf_forward.1} parent=39 // loop_header
              %s258 = sphi 0, %s262
              %p259 = scmp.ge.s32.totalorder %s258, 1
              %s263 = sphi %s0, %s0
              %s264 = sphi [#allocation3], [#allocation3]
            $region43: #{pgcf_forward.1} parent=39 // loop_header_branch
              %261 = sbr.rel (%p259) target = $region47
            $region44: #{pgcf_forward.1} parent=39 // loop_body
              %v265 = vld [vmem:[%s263] sm:%s256]
              %266 = vst [vmem:[%s264] sm:%s256] %v265
            $region45: #{pgcf_forward.1} parent=39 // loop_footer
              %s262 = sadd.s32 1, %s258
            $region46: #{pgcf_forward.1} parent=39 // loop_footer_branch
              %257 = sbr.rel target = $region42
            $region47: #{pgcf_forward.1} parent=39 // loop_exit
              _
          $region40: #{pgcf_forward.1} parent=31 // pred_fallthru
            _
          // Predicated region
          $region63: #{pgcf_forward.1} parent=31 // pred_check
            _
          $region64: #{pgcf_forward.1} parent=31 // pred_check_branch
            %318 = sbr.rel (0) target = $region66
          $region65: #{pgcf_forward.1} parent=31 // pred_region
            %319 = vsyncadd [#allocation4], 2048
          $region66: #{pgcf_forward.1} parent=31 // pred_fallthru
            _
          %s320 = smul.u32 4, 32
          %s321 = smul.u32 %s320, 1
          %s322 = sshll.u32 %s321, 4
          %323 = dma.done [#allocation4], %s322
        $region32: #{pgcf_forward.1} parent=27 // pred_fallthru
          _
        %p324 = scmp.lt.s32.totalorder %s19, 0
        %s325 = ssub.s32 0, %s19
        %s326 = scalar_select %p324, %s325, %s19
        %s327 = sand.u32 %s326, 1
        %s328 = ssub.s32 0, %s327
        %s329 = scalar_select %p324, %s328, %s327
        %p330 = scmp.ne.s32.totalorder %s329, 0
        %p331 = scmp.lt.s32.totalorder %s329, 0
        %p332 = pnand %p331, %p330
        %p333 = pneg %p332
        %s334 = sadd.s32 %s329, 2
        %s335 = scalar_select %p333, %s334, %s329
        %s336 = smul.u32 %s335, 256
        %p337 = scmp.lt.s32.totalorder %s20, 1
        %s338 = scalar_select %p337, 128, 0
        %s339 = sadd.s32 %s336, %s338
        %s340 = smul.u32 %s21, 128
        %s341 = sadd.s32 %s339, %s340
        %s342 = sshra.s32 %s341, 4
        %s343 = sand.u32 %s341, 15
        %s344 = smul.addr %s342, 8
        %s345 = scalar_lea.vmem [#allocation3], %s344
        %v346 = vld [vmem:[%s345] sm:$0xff]
        %v347 = vld [vmem:[%s345 + $0x8] sm:$0xff]
        %v348 = vld [vmem:[%s345 + $0x10] sm:$0xff]
        %v349 = vld [vmem:[%s345 + $0x18] sm:$0xff]
        %v350 = vld [vmem:[%s345 + $0x20] sm:$0xff]
        %v351 = vld [vmem:[%s345 + $0x28] sm:$0xff]
        %v352 = vld [vmem:[%s345 + $0x30] sm:$0xff]
        %v353 = vld [vmem:[%s345 + $0x38] sm:$0xff]
        %v354 = vld [vmem:[%s221] sm:$0xf]
        %v355 = vld [vmem:[%s221 + $0x4] sm:$0xf]
        %v356 = vld [vmem:[%s221 + $0x8] sm:$0xf]
        %v357 = vld [vmem:[%s221 + $0xc] sm:$0xf]
        %v358 = vld [vmem:[%s221 + $0x10] sm:$0xf]
        %v359 = vld [vmem:[%s221 + $0x14] sm:$0xf]
        %v360 = vld [vmem:[%s221 + $0x18] sm:$0xf]
        %v361 = vld [vmem:[%s221 + $0x1c] sm:$0xf]
        %v362 = vld [vmem:[%s221 + $0x20] sm:$0xf]
        %v363 = vld [vmem:[%s221 + $0x24] sm:$0xf]
        %v364 = vld [vmem:[%s221 + $0x28] sm:$0xf]
        %v365 = vld [vmem:[%s221 + $0x2c] sm:$0xf]
        %v366 = vld [vmem:[%s221 + $0x30] sm:$0xf]
        %v367 = vld [vmem:[%s221 + $0x34] sm:$0xf]
        %v368 = vld [vmem:[%s221 + $0x38] sm:$0xf]
        %v369 = vld [vmem:[%s221 + $0x3c] sm:$0xf]
        %v386 = vunpack.c.l.b16 %v354
        %v387 = vunpack.c.l.b16 %v355
        %v388 = vunpack.c.l.b16 %v356
        %v389 = vunpack.c.l.b16 %v357
        %v390 = vunpack.c.l.b16 %v358
        %v391 = vunpack.c.l.b16 %v359
        %v392 = vunpack.c.l.b16 %v360
        %v393 = vunpack.c.l.b16 %v361
        %v394 = vunpack.c.l.b16 %v362
        %v395 = vunpack.c.l.b16 %v363
        %v396 = vunpack.c.l.b16 %v364
        %v397 = vunpack.c.l.b16 %v365
        %v398 = vunpack.c.l.b16 %v366
        %v399 = vunpack.c.l.b16 %v367
        %v400 = vunpack.c.l.b16 %v368
        %v401 = vunpack.c.l.b16 %v369
        %v402 = vpack.c.b16 %v387, %v386
        %v403 = vpack.c.b16 %v389, %v388
        %v404 = vpack.c.b16 %v391, %v390
        %v405 = vpack.c.b16 %v393, %v392
        %v406 = vpack.c.b16 %v395, %v394
        %v407 = vpack.c.b16 %v397, %v396
        %v408 = vpack.c.b16 %v399, %v398
        %v409 = vpack.c.b16 %v401, %v400
        %418 = vmatprep.subr.bf16.mxu0 0
        %419 = vmatpush1.bf16.msra.mxu0 %v346
        %420 = vmatprep.subr.bf16.mxu0 0
        %421 = vmatpush1.bf16.msra.mxu0 %v347
        %422 = vmatprep.subr.bf16.mxu0 0
        %423 = vmatpush1.bf16.msra.mxu0 %v348
        %424 = vmatprep.subr.bf16.mxu0 0
        %425 = vmatpush1.bf16.msra.mxu0 %v349
        %426 = vmatprep.subr.bf16.mxu0 0
        %427 = vmatpush1.bf16.msra.mxu0 %v350
        %428 = vmatprep.subr.bf16.mxu0 0
        %429 = vmatpush1.bf16.msra.mxu0 %v351
        %430 = vmatprep.subr.bf16.mxu0 0
        %431 = vmatpush1.bf16.msra.mxu0 %v352
        %432 = vmatprep.subr.bf16.mxu0 0
        %433 = vmatpush1.bf16.msra.mxu0 %v353
        %434 = vmatprep.subr.bf16.mxu0 0
        %435 = vmatpush1.bf16.msra.mxu0 0
        %436 = vmatprep.subr.bf16.mxu0 0
        %437 = vmatpush1.bf16.msra.mxu0 0
        %438 = vmatprep.subr.bf16.mxu0 0
        %439 = vmatpush1.bf16.msra.mxu0 0
        %440 = vmatprep.subr.bf16.mxu0 0
        %441 = vmatpush1.bf16.msra.mxu0 0
        %442 = vmatprep.subr.bf16.mxu0 0
        %443 = vmatpush1.bf16.msra.mxu0 0
        %444 = vmatprep.subr.bf16.mxu0 0
        %445 = vmatpush1.bf16.msra.mxu0 0
        %446 = vmatprep.subr.bf16.mxu0 0
        %447 = vmatpush1.bf16.msra.mxu0 0
        %448 = vmatprep.subr.bf16.mxu0 0
        %449 = vmatpush1.bf16.msra.mxu0 0
        %450 = vmatprep.mubr.bf16.mxu0 0
        %451 = vmatmul.mubr.bf16.gmra.mrb[0].mxu0 %v402
        %v452 = vpop.f32.mrb[0].mxu0
        %v453 = vadd.f32 0.0, %v452
        %v454 = vpop.f32.mrb[0].mxu0
        %v455 = vpop.f32.mrb[0].mxu0
        %v456 = vadd.f32 0.0, %v455
        %v457 = vpop.f32.mrb[0].mxu0
        %458 = vmatprep.mubr.bf16.mxu0 0
        %459 = vmatmul.mubr.bf16.gmra.mrb[0].mxu0 %v403
        %v460 = vpop.f32.mrb[0].mxu0
        %v461 = vadd.f32 0.0, %v460
        %v462 = vpop.f32.mrb[0].mxu0
        %v463 = vpop.f32.mrb[0].mxu0
        %v464 = vadd.f32 0.0, %v463
        %v465 = vpop.f32.mrb[0].mxu0
        %466 = vmatprep.mubr.bf16.mxu0 0
        %467 = vmatmul.mubr.bf16.gmra.mrb[0].mxu0 %v404
        %v468 = vpop.f32.mrb[0].mxu0
        %v469 = vadd.f32 0.0, %v468
        %v470 = vpop.f32.mrb[0].mxu0
        %v471 = vpop.f32.mrb[0].mxu0
        %v472 = vadd.f32 0.0, %v471
        %v473 = vpop.f32.mrb[0].mxu0
        %474 = vmatprep.mubr.bf16.mxu0 0
        %475 = vmatmul.mubr.bf16.gmra.mrb[0].mxu0 %v405
        %v476 = vpop.f32.mrb[0].mxu0
        %v477 = vadd.f32 0.0, %v476
        %v478 = vpop.f32.mrb[0].mxu0
        %v479 = vpop.f32.mrb[0].mxu0
        %v480 = vadd.f32 0.0, %v479
        %v481 = vpop.f32.mrb[0].mxu0
        %482 = vmatprep.mubr.bf16.mxu0 0
        %483 = vmatmul.mubr.bf16.gmra.mrb[0].mxu0 %v406
        %v484 = vpop.f32.mrb[0].mxu0
        %v485 = vadd.f32 0.0, %v484
        %v486 = vpop.f32.mrb[0].mxu0
        %v487 = vpop.f32.mrb[0].mxu0
        %v488 = vadd.f32 0.0, %v487
        %v489 = vpop.f32.mrb[0].mxu0
        %490 = vmatprep.mubr.bf16.mxu0 0
        %491 = vmatmul.mubr.bf16.gmra.mrb[0].mxu0 %v407
        %v492 = vpop.f32.mrb[0].mxu0
        %v493 = vadd.f32 0.0, %v492
        %v494 = vpop.f32.mrb[0].mxu0
        %v495 = vpop.f32.mrb[0].mxu0
        %v496 = vadd.f32 0.0, %v495
        %v497 = vpop.f32.mrb[0].mxu0
        %498 = vmatprep.mubr.bf16.mxu0 0
        %499 = vmatmul.mubr.bf16.gmra.mrb[0].mxu0 %v408
        %v500 = vpop.f32.mrb[0].mxu0
        %v501 = vadd.f32 0.0, %v500
        %v502 = vpop.f32.mrb[0].mxu0
        %v503 = vpop.f32.mrb[0].mxu0
        %v504 = vadd.f32 0.0, %v503
        %v505 = vpop.f32.mrb[0].mxu0
        %506 = vmatprep.mubr.bf16.mxu0 0
        %507 = vmatmul.mubr.bf16.gmra.mrb[0].mxu0 %v409
        %v508 = vpop.f32.mrb[0].mxu0
        %v509 = vadd.f32 0.0, %v508
        %v510 = vpop.f32.mrb[0].mxu0
        %v511 = vpop.f32.mrb[0].mxu0
        %v512 = vadd.f32 0.0, %v511
        %v513 = vpop.f32.mrb[0].mxu0
        %514 = vdwg.mxu0
        // Predicated region
        $region67: #{pgcf_forward.1} parent=27 // pred_check
          %p515 = pneg %p243
        $region68: #{pgcf_forward.1} parent=27 // pred_check_branch
          %517 = sbr.rel (%p515) target = $region70
        $region69: #{pgcf_forward.1} parent=27 // pred_region
          %s518 = smul.u32 %s20, 128
          %s519 = sadd.s32 %s336, %s518
          %s520 = sshra.s32 %s519, 4
          %s521 = sand.u32 %s519, 15
          %s522 = smul.addr %s520, 8
          %s523 = scalar_lea.vmem [#allocation3], %s522
          %v524 = vld [vmem:[%s523] sm:$0xff]
          %v525 = vld [vmem:[%s523 + $0x8] sm:$0xff]
          %v526 = vld [vmem:[%s523 + $0x10] sm:$0xff]
          %v527 = vld [vmem:[%s523 + $0x18] sm:$0xff]
          %v528 = vld [vmem:[%s523 + $0x20] sm:$0xff]
          %v529 = vld [vmem:[%s523 + $0x28] sm:$0xff]
          %v530 = vld [vmem:[%s523 + $0x30] sm:$0xff]
          %v531 = vld [vmem:[%s523 + $0x38] sm:$0xff]
          %v532 = vunpack.c.l.bf16 %v524
          %v533 = vunpack.c.h.bf16 %v524
          %v534 = vunpack.c.l.bf16 %v525
          %v535 = vunpack.c.h.bf16 %v525
          %v536 = vunpack.c.l.bf16 %v526
          %v537 = vunpack.c.h.bf16 %v526
          %v538 = vunpack.c.l.bf16 %v527
          %v539 = vunpack.c.h.bf16 %v527
          %v540 = vunpack.c.l.bf16 %v528
          %v541 = vunpack.c.h.bf16 %v528
          %v542 = vunpack.c.l.bf16 %v529
          %v543 = vunpack.c.h.bf16 %v529
          %v544 = vunpack.c.l.bf16 %v530
          %v545 = vunpack.c.h.bf16 %v530
          %v546 = vunpack.c.l.bf16 %v531
          %v547 = vunpack.c.h.bf16 %v531
          %v548 = vld [vmem:[%s212] sm:$0xff]
          %v549 = vld [vmem:[%s212 + $0x8] sm:$0xff]
          %v550 = vld [vmem:[%s212 + $0x10] sm:$0xff]
          %v551 = vld [vmem:[%s212 + $0x18] sm:$0xff]
          %v552 = vld [vmem:[%s212 + $0x20] sm:$0xff]
          %v553 = vld [vmem:[%s212 + $0x28] sm:$0xff]
          %v554 = vld [vmem:[%s212 + $0x30] sm:$0xff]
          %v555 = vld [vmem:[%s212 + $0x38] sm:$0xff]
          %v556 = vld [vmem:[%s212 + $0x40] sm:$0xff]
          %v557 = vld [vmem:[%s212 + $0x48] sm:$0xff]
          %v558 = vld [vmem:[%s212 + $0x50] sm:$0xff]
          %v559 = vld [vmem:[%s212 + $0x58] sm:$0xff]
          %v560 = vld [vmem:[%s212 + $0x60] sm:$0xff]
          %v561 = vld [vmem:[%s212 + $0x68] sm:$0xff]
          %v562 = vld [vmem:[%s212 + $0x70] sm:$0xff]
          %v563 = vld [vmem:[%s212 + $0x78] sm:$0xff]
          %565 = vset.pattern.permute.xlu0 0
          %566 = vperm.xlu0 %565, %v548
          %v567 = vpop.permute.xlu0 %566
          %570 = vset.pattern.permute.xlu0 0
          %571 = vperm.xlu0 %570, %v549
          %v572 = vpop.permute.xlu0 %571
          %575 = vset.pattern.permute.xlu0 0
          %576 = vperm.xlu0 %575, %v550
          %v577 = vpop.permute.xlu0 %576
          %580 = vset.pattern.permute.xlu0 0
          %581 = vperm.xlu0 %580, %v551
          %v582 = vpop.permute.xlu0 %581
          %585 = vset.pattern.permute.xlu0 0
          %586 = vperm.xlu0 %585, %v552
          %v587 = vpop.permute.xlu0 %586
          %590 = vset.pattern.permute.xlu0 0
          %591 = vperm.xlu0 %590, %v553
          %v592 = vpop.permute.xlu0 %591
          %595 = vset.pattern.permute.xlu0 0
          %596 = vperm.xlu0 %595, %v554
          %v597 = vpop.permute.xlu0 %596
          %600 = vset.pattern.permute.xlu0 0
          %601 = vperm.xlu0 %600, %v555
          %v602 = vpop.permute.xlu0 %601
          %605 = vset.pattern.permute.xlu0 0
          %606 = vperm.xlu0 %605, %v556
          %v607 = vpop.permute.xlu0 %606
          %610 = vset.pattern.permute.xlu0 0
          %611 = vperm.xlu0 %610, %v557
          %v612 = vpop.permute.xlu0 %611
          %615 = vset.pattern.permute.xlu0 0
          %616 = vperm.xlu0 %615, %v558
          %v617 = vpop.permute.xlu0 %616
          %620 = vset.pattern.permute.xlu0 0
          %621 = vperm.xlu0 %620, %v559
          %v622 = vpop.permute.xlu0 %621
          %625 = vset.pattern.permute.xlu0 0
          %626 = vperm.xlu0 %625, %v560
          %v627 = vpop.permute.xlu0 %626
          %630 = vset.pattern.permute.xlu0 0
          %631 = vperm.xlu0 %630, %v561
          %v632 = vpop.permute.xlu0 %631
          %635 = vset.pattern.permute.xlu0 0
          %636 = vperm.xlu0 %635, %v562
          %v637 = vpop.permute.xlu0 %636
          %640 = vset.pattern.permute.xlu0 0
          %641 = vperm.xlu0 %640, %v563
          %v642 = vpop.permute.xlu0 %641
          %v644 = vmul.f32 %v567, %v532
          %v645 = vmul.f32 %v572, %v533
          %v646 = vmul.f32 %v577, %v534
          %v647 = vmul.f32 %v582, %v535
          %v648 = vmul.f32 %v587, %v536
          %v649 = vmul.f32 %v592, %v537
          %v650 = vmul.f32 %v597, %v538
          %v651 = vmul.f32 %v602, %v539
          %v652 = vmul.f32 %v607, %v540
          %v653 = vmul.f32 %v612, %v541
          %v654 = vmul.f32 %v617, %v542
          %v655 = vmul.f32 %v622, %v543
          %v656 = vmul.f32 %v627, %v544
          %v657 = vmul.f32 %v632, %v545
          %v658 = vmul.f32 %v637, %v546
          %v659 = vmul.f32 %v642, %v547
          %v660 = vadd.f32 %v644, %v453
          %v661 = vadd.f32 %v645, %v456
          %v662 = vadd.f32 %v646, %v461
          %v663 = vadd.f32 %v647, %v464
          %v664 = vadd.f32 %v648, %v469
          %v665 = vadd.f32 %v649, %v472
          %v666 = vadd.f32 %v650, %v477
          %v667 = vadd.f32 %v651, %v480
          %v668 = vadd.f32 %v652, %v485
          %v669 = vadd.f32 %v653, %v488
          %v670 = vadd.f32 %v654, %v493
          %v671 = vadd.f32 %v655, %v496
          %v672 = vadd.f32 %v656, %v501
          %v673 = vadd.f32 %v657, %v504
          %v674 = vadd.f32 %v658, %v509
          %v675 = vadd.f32 %v659, %v512
          %676 = vst [vmem:[#allocation2] sm:$0xff] %v660
          %677 = vst [vmem:[#allocation2 + $0x8] sm:$0xff] %v661
          %678 = vst [vmem:[#allocation2 + $0x10] sm:$0xff] %v662
          %679 = vst [vmem:[#allocation2 + $0x18] sm:$0xff] %v663
          %680 = vst [vmem:[#allocation2 + $0x20] sm:$0xff] %v664
          %681 = vst [vmem:[#allocation2 + $0x28] sm:$0xff] %v665
          %682 = vst [vmem:[#allocation2 + $0x30] sm:$0xff] %v666
          %683 = vst [vmem:[#allocation2 + $0x38] sm:$0xff] %v667
          %684 = vst [vmem:[#allocation2 + $0x40] sm:$0xff] %v668
          %685 = vst [vmem:[#allocation2 + $0x48] sm:$0xff] %v669
          %686 = vst [vmem:[#allocation2 + $0x50] sm:$0xff] %v670
          %687 = vst [vmem:[#allocation2 + $0x58] sm:$0xff] %v671
          %688 = vst [vmem:[#allocation2 + $0x60] sm:$0xff] %v672
          %689 = vst [vmem:[#allocation2 + $0x68] sm:$0xff] %v673
          %690 = vst [vmem:[#allocation2 + $0x70] sm:$0xff] %v674
          %691 = vst [vmem:[#allocation2 + $0x78] sm:$0xff] %v675
        $region70: #{pgcf_forward.1} parent=27 // pred_fallthru
          _
        %p692 = scmp.ne.s32.totalorder %s21, 0
        // Predicated region
        $region71: #{pgcf_forward.1} parent=27 // pred_check
          %p693 = pneg %p692
        $region72: #{pgcf_forward.1} parent=27 // pred_check_branch
          %695 = sbr.rel (%p693) target = $region74
        $region73: #{pgcf_forward.1} parent=27 // pred_region
          %v696 = vld [vmem:[#allocation2] sm:$0xff]
          %v697 = vld [vmem:[#allocation2 + $0x8] sm:$0xff]
          %v698 = vld [vmem:[#allocation2 + $0x10] sm:$0xff]
          %v699 = vld [vmem:[#allocation2 + $0x18] sm:$0xff]
          %v700 = vld [vmem:[#allocation2 + $0x20] sm:$0xff]
          %v701 = vld [vmem:[#allocation2 + $0x28] sm:$0xff]
          %v702 = vld [vmem:[#allocation2 + $0x30] sm:$0xff]
          %v703 = vld [vmem:[#allocation2 + $0x38] sm:$0xff]
          %v704 = vld [vmem:[#allocation2 + $0x40] sm:$0xff]
          %v705 = vld [vmem:[#allocation2 + $0x48] sm:$0xff]
          %v706 = vld [vmem:[#allocation2 + $0x50] sm:$0xff]
          %v707 = vld [vmem:[#allocation2 + $0x58] sm:$0xff]
          %v708 = vld [vmem:[#allocation2 + $0x60] sm:$0xff]
          %v709 = vld [vmem:[#allocation2 + $0x68] sm:$0xff]
          %v710 = vld [vmem:[#allocation2 + $0x70] sm:$0xff]
          %v711 = vld [vmem:[#allocation2 + $0x78] sm:$0xff]
          %v712 = vadd.f32 %v696, %v453
          %v713 = vadd.f32 %v697, %v456
          %v714 = vadd.f32 %v698, %v461
          %v715 = vadd.f32 %v699, %v464
          %v716 = vadd.f32 %v700, %v469
          %v717 = vadd.f32 %v701, %v472
          %v718 = vadd.f32 %v702, %v477
          %v719 = vadd.f32 %v703, %v480
          %v720 = vadd.f32 %v704, %v485
          %v721 = vadd.f32 %v705, %v488
          %v722 = vadd.f32 %v706, %v493
          %v723 = vadd.f32 %v707, %v496
          %v724 = vadd.f32 %v708, %v501
          %v725 = vadd.f32 %v709, %v504
          %v726 = vadd.f32 %v710, %v509
          %v727 = vadd.f32 %v711, %v512
          %728 = vst [vmem:[#allocation2] sm:$0xff] %v712
          %729 = vst [vmem:[#allocation2 + $0x8] sm:$0xff] %v713
          %730 = vst [vmem:[#allocation2 + $0x10] sm:$0xff] %v714
          %731 = vst [vmem:[#allocation2 + $0x18] sm:$0xff] %v715
          %732 = vst [vmem:[#allocation2 + $0x20] sm:$0xff] %v716
          %733 = vst [vmem:[#allocation2 + $0x28] sm:$0xff] %v717
          %734 = vst [vmem:[#allocation2 + $0x30] sm:$0xff] %v718
          %735 = vst [vmem:[#allocation2 + $0x38] sm:$0xff] %v719
          %736 = vst [vmem:[#allocation2 + $0x40] sm:$0xff] %v720
          %737 = vst [vmem:[#allocation2 + $0x48] sm:$0xff] %v721
          %738 = vst [vmem:[#allocation2 + $0x50] sm:$0xff] %v722
          %739 = vst [vmem:[#allocation2 + $0x58] sm:$0xff] %v723
          %740 = vst [vmem:[#allocation2 + $0x60] sm:$0xff] %v724
          %741 = vst [vmem:[#allocation2 + $0x68] sm:$0xff] %v725
          %742 = vst [vmem:[#allocation2 + $0x70] sm:$0xff] %v726
          %743 = vst [vmem:[#allocation2 + $0x78] sm:$0xff] %v727
        $region74: #{pgcf_forward.1} parent=27 // pred_fallthru
          _
        // Predicated region
        $region75: #{pgcf_forward.1} parent=27 // pred_check
          %p744 = pneg %p243
        $region76: #{pgcf_forward.1} parent=27 // pred_check_branch
          %746 = sbr.rel (%p744) target = $region78
        $region77: #{pgcf_forward.1} parent=27 // pred_region
          %v747 = vld [vmem:[#allocation2] sm:$0xff]
          %v748 = vld [vmem:[#allocation2 + $0x8] sm:$0xff]
          %v749 = vld [vmem:[#allocation2 + $0x10] sm:$0xff]
          %v750 = vld [vmem:[#allocation2 + $0x18] sm:$0xff]
          %v751 = vld [vmem:[#allocation2 + $0x20] sm:$0xff]
          %v752 = vld [vmem:[#allocation2 + $0x28] sm:$0xff]
          %v753 = vld [vmem:[#allocation2 + $0x30] sm:$0xff]
          %v754 = vld [vmem:[#allocation2 + $0x38] sm:$0xff]
          %v755 = vld [vmem:[#allocation2 + $0x40] sm:$0xff]
          %v756 = vld [vmem:[#allocation2 + $0x48] sm:$0xff]
          %v757 = vld [vmem:[#allocation2 + $0x50] sm:$0xff]
          %v758 = vld [vmem:[#allocation2 + $0x58] sm:$0xff]
          %v759 = vld [vmem:[#allocation2 + $0x60] sm:$0xff]
          %v760 = vld [vmem:[#allocation2 + $0x68] sm:$0xff]
          %v761 = vld [vmem:[#allocation2 + $0x70] sm:$0xff]
          %v762 = vld [vmem:[#allocation2 + $0x78] sm:$0xff]
          %763 = vst [vmem:[%s207] sm:$0xff] %v747
          %764 = vst [vmem:[%s207 + $0x8] sm:$0xff] %v748
          %765 = vst [vmem:[%s207 + $0x10] sm:$0xff] %v749
          %766 = vst [vmem:[%s207 + $0x18] sm:$0xff] %v750
          %767 = vst [vmem:[%s207 + $0x20] sm:$0xff] %v751
          %768 = vst [vmem:[%s207 + $0x28] sm:$0xff] %v752
          %769 = vst [vmem:[%s207 + $0x30] sm:$0xff] %v753
          %770 = vst [vmem:[%s207 + $0x38] sm:$0xff] %v754
          %771 = vst [vmem:[%s207 + $0x40] sm:$0xff] %v755
          %772 = vst [vmem:[%s207 + $0x48] sm:$0xff] %v756
          %773 = vst [vmem:[%s207 + $0x50] sm:$0xff] %v757
          %774 = vst [vmem:[%s207 + $0x58] sm:$0xff] %v758
          %775 = vst [vmem:[%s207 + $0x60] sm:$0xff] %v759
          %776 = vst [vmem:[%s207 + $0x68] sm:$0xff] %v760
          %777 = vst [vmem:[%s207 + $0x70] sm:$0xff] %v761
          %778 = vst [vmem:[%s207 + $0x78] sm:$0xff] %v762
          %p779 = scmp.ne.s32.totalorder %s19, 2
          // Predicated region
          $region79: #{pgcf_forward.1} parent=77 // pred_check
            %p780 = pneg %p779
          $region80: #{pgcf_forward.1} parent=77 // pred_check_branch
            %782 = sbr.rel (%p780) target = $region82
          $region81: #{pgcf_forward.1} parent=77 // pred_region
            %s783 = sadd.s32 %s19, 1
            %p784 = scmp.lt.s32.totalorder %s783, 0
            %s785 = ssub.s32 0, %s783
            %s786 = scalar_select %p784, %s785, %s783
            %s787 = sand.u32 %s786, 1
            %s788 = ssub.s32 0, %s787
            %s789 = scalar_select %p784, %s788, %s787
            %p790 = scmp.ne.s32.totalorder %s789, 0
            %p791 = scmp.lt.s32.totalorder %s789, 0
            %p792 = pnand %p791, %p790
            %p793 = pneg %p792
            %s794 = sadd.s32 %s789, 2
            %s795 = scalar_select %p793, %s794, %s789
            %s796 = smul.u32 %s795, 256
            %s797 = smul.u32 %s20, 128
            %s798 = sadd.s32 %s796, %s797
            %v799 = vld [vmem:[#allocation2] sm:$0xff]
            %v800 = vld [vmem:[#allocation2 + $0x8] sm:$0xff]
            %v801 = vld [vmem:[#allocation2 + $0x10] sm:$0xff]
            %v802 = vld [vmem:[#allocation2 + $0x18] sm:$0xff]
            %v803 = vld [vmem:[#allocation2 + $0x20] sm:$0xff]
            %v804 = vld [vmem:[#allocation2 + $0x28] sm:$0xff]
            %v805 = vld [vmem:[#allocation2 + $0x30] sm:$0xff]
            %v806 = vld [vmem:[#allocation2 + $0x38] sm:$0xff]
            %v807 = vld [vmem:[#allocation2 + $0x40] sm:$0xff]
            %v808 = vld [vmem:[#allocation2 + $0x48] sm:$0xff]
            %v809 = vld [vmem:[#allocation2 + $0x50] sm:$0xff]
            %v810 = vld [vmem:[#allocation2 + $0x58] sm:$0xff]
            %v811 = vld [vmem:[#allocation2 + $0x60] sm:$0xff]
            %v812 = vld [vmem:[#allocation2 + $0x68] sm:$0xff]
            %v813 = vld [vmem:[#allocation2 + $0x70] sm:$0xff]
            %v814 = vld [vmem:[#allocation2 + $0x78] sm:$0xff]
            %v815 = vpack.c.bf16 %v800, %v799
            %v816 = vpack.c.bf16 %v802, %v801
            %v817 = vpack.c.bf16 %v804, %v803
            %v818 = vpack.c.bf16 %v806, %v805
            %v819 = vpack.c.bf16 %v808, %v807
            %v820 = vpack.c.bf16 %v810, %v809
            %v821 = vpack.c.bf16 %v812, %v811
            %v822 = vpack.c.bf16 %v814, %v813
            %s823 = sshra.s32 %s798, 4
            %s824 = sand.u32 %s798, 15
            %s825 = smul.addr %s823, 8
            %s826 = scalar_lea.vmem [#allocation3], %s825
            %827 = vst [vmem:[%s826] sm:$0xff] %v815
            %828 = vst [vmem:[%s826 + $0x8] sm:$0xff] %v816
            %829 = vst [vmem:[%s826 + $0x10] sm:$0xff] %v817
            %830 = vst [vmem:[%s826 + $0x18] sm:$0xff] %v818
            %831 = vst [vmem:[%s826 + $0x20] sm:$0xff] %v819
            %832 = vst [vmem:[%s826 + $0x28] sm:$0xff] %v820
            %833 = vst [vmem:[%s826 + $0x30] sm:$0xff] %v821
            %834 = vst [vmem:[%s826 + $0x38] sm:$0xff] %v822
          $region82: #{pgcf_forward.1} parent=77 // pred_fallthru
            _
        $region78: #{pgcf_forward.1} parent=27 // pred_fallthru
          _
        %s835 = sand.u32 %s125, 1
        %s836 = sand.u32 %s125, 1
        %s837 = smul.addr %s836, 128
        %s838 = scalar_lea.vmem [#allocation5], %s837
        // Predicated region
        $region83: #{pgcf_forward.1} parent=27 // pred_check
          %p839 = pneg %p135
        $region84: #{pgcf_forward.1} parent=27 // pred_check_branch
          %841 = sbr.rel (%p839) target = $region86
        $region85: #{pgcf_forward.1} parent=27 // pred_region
          %s842 = sadd.s32 %s19, 1
          %p843 = scmp.lt.s32.totalorder %s842, 0
          %s844 = ssub.s32 0, %s842
          %s845 = scalar_select %p843, %s844, %s842
          %s846 = sdiv.u32.pop %s845, 3
          %s847 = srem.u32.pop %s845, 3
          %s848 = ssub.s32 0, %s847
          %s849 = scalar_select %p843, %s848, %s847
          %p850 = scmp.ne.s32.totalorder %s849, 0
          %p851 = scmp.lt.s32.totalorder %s849, 0
          %p852 = pnand %p851, %p850
          %p853 = pneg %p852
          %s854 = sadd.s32 %s849, 3
          %s855 = scalar_select %p853, %s854, %s849
          %s856 = smul.u32 16, %s20
          %s857 = smul.addr %s856, 3
          %s858 = sadd.s32 %s855, %s857
          %s859 = smul.addr %s858, 8
          %s860 = scalar_lea.vmem %s3, %s859
          // Predicated region
          $region87: #{pgcf_forward.1} parent=85 // pred_check
            _
          $region88: #{pgcf_forward.1} parent=85 // pred_check_branch
            %862 = sbr.rel (0) target = $region90
          $region89: #{pgcf_forward.1} parent=85 // pred_region
            // Predicated region
            $region91: #{pgcf_forward.1} parent=89 // pred_check
              _
            $region92: #{pgcf_forward.1} parent=89 // pred_check_branch
              %864 = sbr.rel (0) target = $region94
            $region93: #{pgcf_forward.1} parent=89 // pred_region
              // Predicated region
              $region106: #{pgcf_forward.1} parent=93 // pred_check
                _
              $region107: #{pgcf_forward.1} parent=93 // pred_check_branch
                %909 = sbr.rel (0) target = $region109
              $region108: #{pgcf_forward.1} parent=93 // pred_region
                loop: start=0, step=1, limit=1
                $region110: #{pgcf_forward.1} parent=108 // loop_pre_header
                  _
                $region111: #{pgcf_forward.1} parent=108 // loop_header
                  %s911 = sphi 0, %s915
                  %p912 = scmp.ge.s32.totalorder %s911, 1
                  %s916 = sphi %s838, %s838
                  %s917 = sphi %s860, %s860
                $region112: #{pgcf_forward.1} parent=108 // loop_header_branch
                  %914 = sbr.rel (%p912) target = $region116
                $region113: #{pgcf_forward.1} parent=108 // loop_body
                  %v918 = vld [vmem:[%s916] sm:$0xff]
                  %919 = vst [vmem:[%s917] sm:$0xff] %v918
                  %v920 = vld [vmem:[%s916 + $0x8] sm:$0xff]
                  %921 = vst [vmem:[%s917 + $0x18] sm:$0xff] %v920
                  %v922 = vld [vmem:[%s916 + $0x10] sm:$0xff]
                  %923 = vst [vmem:[%s917 + $0x30] sm:$0xff] %v922
                  %v924 = vld [vmem:[%s916 + $0x18] sm:$0xff]
                  %925 = vst [vmem:[%s917 + $0x48] sm:$0xff] %v924
                  %v926 = vld [vmem:[%s916 + $0x20] sm:$0xff]
                  %927 = vst [vmem:[%s917 + $0x60] sm:$0xff] %v926
                  %v928 = vld [vmem:[%s916 + $0x28] sm:$0xff]
                  %929 = vst [vmem:[%s917 + $0x78] sm:$0xff] %v928
                  %v930 = vld [vmem:[%s916 + $0x30] sm:$0xff]
                  %931 = vst [vmem:[%s917 + $0x90] sm:$0xff] %v930
                  %v932 = vld [vmem:[%s916 + $0x38] sm:$0xff]
                  %933 = vst [vmem:[%s917 + $0xa8] sm:$0xff] %v932
                  %v934 = vld [vmem:[%s916 + $0x40] sm:$0xff]
                  %935 = vst [vmem:[%s917 + $0xc0] sm:$0xff] %v934
                  %v936 = vld [vmem:[%s916 + $0x48] sm:$0xff]
                  %937 = vst [vmem:[%s917 + $0xd8] sm:$0xff] %v936
                  %v938 = vld [vmem:[%s916 + $0x50] sm:$0xff]
                  %939 = vst [vmem:[%s917 + $0xf0] sm:$0xff] %v938
                  %v940 = vld [vmem:[%s916 + $0x58] sm:$0xff]
                  %941 = vst [vmem:[%s917 + $0x108] sm:$0xff] %v940
                  %v942 = vld [vmem:[%s916 + $0x60] sm:$0xff]
                  %943 = vst [vmem:[%s917 + $0x120] sm:$0xff] %v942
                  %v944 = vld [vmem:[%s916 + $0x68] sm:$0xff]
                  %945 = vst [vmem:[%s917 + $0x138] sm:$0xff] %v944
                  %v946 = vld [vmem:[%s916 + $0x70] sm:$0xff]
                  %947 = vst [vmem:[%s917 + $0x150] sm:$0xff] %v946
                  %v948 = vld [vmem:[%s916 + $0x78] sm:$0xff]
                  %949 = vst [vmem:[%s917 + $0x168] sm:$0xff] %v948
                $region114: #{pgcf_forward.1} parent=108 // loop_footer
                  %s915 = sadd.s32 1, %s911
                $region115: #{pgcf_forward.1} parent=108 // loop_footer_branch
                  %910 = sbr.rel target = $region111
                $region116: #{pgcf_forward.1} parent=108 // loop_exit
                  _
              $region109: #{pgcf_forward.1} parent=93 // pred_fallthru
                _
              // Predicated region
              $region117: #{pgcf_forward.1} parent=93 // pred_check
                _
              $region118: #{pgcf_forward.1} parent=93 // pred_check_branch
                %951 = sbr.rel target = $region120
              $region119: #{pgcf_forward.1} parent=93 // pred_region
                _
              $region120: #{pgcf_forward.1} parent=93 // pred_fallthru
                _
            $region94: #{pgcf_forward.1} parent=89 // pred_fallthru
              _
            // Predicated region
            $region95: #{pgcf_forward.1} parent=89 // pred_check
              _
            $region96: #{pgcf_forward.1} parent=89 // pred_check_branch
              %866 = sbr.rel target = $region98
            $region97: #{pgcf_forward.1} parent=89 // pred_region
              loop: start=0, step=1, limit=1
              $region99: #{pgcf_forward.1} parent=97 // loop_pre_header
                _
              $region100: #{pgcf_forward.1} parent=97 // loop_header
                %s869 = sphi 0, %s873
                %p870 = scmp.ge.s32.totalorder %s869, 1
                %s874 = sphi %s838, %s838
                %s875 = sphi %s860, %s860
              $region101: #{pgcf_forward.1} parent=97 // loop_header_branch
                %872 = sbr.rel (%p870) target = $region105
              $region102: #{pgcf_forward.1} parent=97 // loop_body
                %v876 = vld [vmem:[%s874] sm:$0xff]
                %877 = vst [vmem:[%s875] sm:$0xff] %v876
                %v878 = vld [vmem:[%s874 + $0x8] sm:$0xff]
                %879 = vst [vmem:[%s875 + $0x18] sm:$0xff] %v878
                %v880 = vld [vmem:[%s874 + $0x10] sm:$0xff]
                %881 = vst [vmem:[%s875 + $0x30] sm:$0xff] %v880
                %v882 = vld [vmem:[%s874 + $0x18] sm:$0xff]
                %883 = vst [vmem:[%s875 + $0x48] sm:$0xff] %v882
                %v884 = vld [vmem:[%s874 + $0x20] sm:$0xff]
                %885 = vst [vmem:[%s875 + $0x60] sm:$0xff] %v884
                %v886 = vld [vmem:[%s874 + $0x28] sm:$0xff]
                %887 = vst [vmem:[%s875 + $0x78] sm:$0xff] %v886
                %v888 = vld [vmem:[%s874 + $0x30] sm:$0xff]
                %889 = vst [vmem:[%s875 + $0x90] sm:$0xff] %v888
                %v890 = vld [vmem:[%s874 + $0x38] sm:$0xff]
                %891 = vst [vmem:[%s875 + $0xa8] sm:$0xff] %v890
                %v892 = vld [vmem:[%s874 + $0x40] sm:$0xff]
                %893 = vst [vmem:[%s875 + $0xc0] sm:$0xff] %v892
                %v894 = vld [vmem:[%s874 + $0x48] sm:$0xff]
                %895 = vst [vmem:[%s875 + $0xd8] sm:$0xff] %v894
                %v896 = vld [vmem:[%s874 + $0x50] sm:$0xff]
                %897 = vst [vmem:[%s875 + $0xf0] sm:$0xff] %v896
                %v898 = vld [vmem:[%s874 + $0x58] sm:$0xff]
                %899 = vst [vmem:[%s875 + $0x108] sm:$0xff] %v898
                %v900 = vld [vmem:[%s874 + $0x60] sm:$0xff]
                %901 = vst [vmem:[%s875 + $0x120] sm:$0xff] %v900
                %v902 = vld [vmem:[%s874 + $0x68] sm:$0xff]
                %903 = vst [vmem:[%s875 + $0x138] sm:$0xff] %v902
                %v904 = vld [vmem:[%s874 + $0x70] sm:$0xff]
                %905 = vst [vmem:[%s875 + $0x150] sm:$0xff] %v904
                %v906 = vld [vmem:[%s874 + $0x78] sm:$0xff]
                %907 = vst [vmem:[%s875 + $0x168] sm:$0xff] %v906
              $region103: #{pgcf_forward.1} parent=97 // loop_footer
                %s873 = sadd.s32 1, %s869
              $region104: #{pgcf_forward.1} parent=97 // loop_footer_branch
                %868 = sbr.rel target = $region100
              $region105: #{pgcf_forward.1} parent=97 // loop_exit
                _
            $region98: #{pgcf_forward.1} parent=89 // pred_fallthru
              _
          $region90: #{pgcf_forward.1} parent=85 // pred_fallthru
            _
          %952 = vnop
        $region86: #{pgcf_forward.1} parent=27 // pred_fallthru
          _
      $region28: #{pgcf_forward.1} parent=5 // pred_fallthru
        _
      %p953 = scmp.le.s32.totalorder 2, %s9
      // Predicated region
      $region121: #{pgcf_forward.1} parent=5 // pred_check
        %p954 = pneg %p953
      $region122: #{pgcf_forward.1} parent=5 // pred_check_branch
        %956 = sbr.rel (%p954) target = $region124
      $region123: #{pgcf_forward.1} parent=5 // pred_region
        %s957 = ssub.s32 %s9, 2
        // Predicated region
        $region125: #{pgcf_forward.1} parent=123 // pred_check
          %p958 = pneg %p141
        $region126: #{pgcf_forward.1} parent=123 // pred_check_branch
          %960 = sbr.rel (%p958) target = $region128
        $region127: #{pgcf_forward.1} parent=123 // pred_region
          %s961 = sand.u32 %s126, 1
          %s962 = sand.u32 %s126, 1
          %s963 = smul.addr %s962, 128
          %s964 = scalar_lea.vmem [#allocation5], %s963
        $region128: #{pgcf_forward.1} parent=123 // pred_fallthru
          _
      $region124: #{pgcf_forward.1} parent=5 // pred_fallthru
        _
    $region6: #{pgcf_forward.1} parent=1 // loop_footer
      %s13 = sadd.s32 1, %s9
    $region7: #{pgcf_forward.1} parent=1 // loop_footer_branch
      %8 = sbr.rel target = $region3
    $region8: #{pgcf_forward.1} parent=1 // loop_exit
      _
  %965 = vsyncmov [#allocation4]
  %s966 = vpop.sfrf %965
  %p967 = scmp.eq.s32.totalorder %s966, 0
  %p968 = pneg %p967
  %970 = shalt.err (%p968)

</llo_original>
